<compile_context>
chip_gen: v6e
topology: v6e:2x2x1
jax: 0.10.0
libtpu: 0.0.40
codegen_flags: <defaults>
</compile_context>

<pallas_src>
import jax
import jax.numpy as jnp
from jax.experimental import pallas as pl
from jax.experimental.pallas import tpu as pltpu

_LANES = 128
_MIN_TILE_BYTES = 512 * 1024        # floor so per-step overhead stays small
_MAX_TILE_BYTES = 4 * 1024 * 1024   # per-buffer target (in+out double-buffered)
_MIN_GRID_STEPS = 8                 # keep grid long enough for megacore + pipeline
_VMEM_LIMIT_BYTES = 32 * 1024 * 1024


def _drop_path_kernel(scale_ref, x_ref, o_ref):
    """One (block_n, block_feat) lane-dense tile.

    scale_ref : (block_n, 1) per-sample scale (0 or 1/keep_prob) in x.dtype
    x_ref/o_ref : (block_n, block_feat) VMEM tiles
    """
    o_ref[...] = x_ref[...] * scale_ref[...]


def _choose_block(n, feat, itemsize):
    """Pick (block_n, block_feat) for the (n, feat) view.

    block_feat is a multiple of 128 (or == feat), block_n is a multiple of the
    sublane granularity (or == n).  Each buffer is ~0.5-4 MiB; large tensors
    get >= ~8 grid steps, small tensors collapse to a single block.
    Ragged edge blocks are masked by Pallas (elementwise op -> don't-care).
    """
    total_bytes = n * feat * itemsize
    target = min(_MAX_TILE_BYTES,
                 max(_MIN_TILE_BYTES, total_bytes // _MIN_GRID_STEPS))

    # Sublane granularity: 8 (f32), 16 (bf16/f16), 32 (int8/fp8).
    sub = max(8, 8 * (4 // max(1, itemsize)))
    feat_cols = pl.cdiv(feat, _LANES)

    rows_assumed = min(n, sub)
    cols_budget = max(1, target // (rows_assumed * _LANES * itemsize))
    if cols_budget >= feat_cols:
        block_feat = feat                     # full feature dim (always legal)
    else:
        block_feat = cols_budget * _LANES     # multiple of 128, < feat

    rows_budget = max(1, target // (block_feat * itemsize))
    if rows_budget >= n:
        block_n = n                           # full batch dim (always legal)
    else:
        block_n = max(sub, (rows_budget // sub) * sub)  # multiple of sub, < n
    return block_n, block_feat


def drop_path(x, drop_prob: float = 0.0, *, training: bool = False,
              rng_key=None, donate_x: bool = False):
    """Pallas TPU equivalent of drop_path_f / DropPath.forward."""
    if drop_prob == 0.0 or not training:
        # Identity fast path, exactly like the PyTorch module (no kernel).
        return x
    if rng_key is None:
        raise ValueError("drop_path in training mode needs an rng_key")

    keep_prob = 1.0 - float(drop_prob)
    n = int(x.shape[0])
    feat = 1
    for d in x.shape[1:]:
        feat *= int(d)

    # Per-sample keep decision (mirrors torch.rand + floor_), folded with the
    # 1/keep_prob rescale into one scale per sample, cast to x.dtype so the
    # kernel multiplies in the native dtype.
    u = jax.random.uniform(rng_key, (n,), dtype=jnp.float32)
    scale = (jnp.floor(keep_prob + u) / keep_prob).astype(x.dtype).reshape(n, 1)

    x_flat = x.reshape(n, feat)   # free metadata reshape; no padding copies
    itemsize = jnp.dtype(x.dtype).itemsize
    block_n, block_feat = _choose_block(n, feat, itemsize)
    grid = (pl.cdiv(n, block_n), pl.cdiv(feat, block_feat))

    out_flat = pl.pallas_call(
        _drop_path_kernel,
        out_shape=jax.ShapeDtypeStruct((n, feat), x.dtype),
        grid=grid,
        in_specs=[
            pl.BlockSpec((block_n, 1), lambda i, j: (i, 0)),
            pl.BlockSpec((block_n, block_feat), lambda i, j: (i, j)),
        ],
        out_specs=pl.BlockSpec((block_n, block_feat), lambda i, j: (i, j)),
        compiler_params=pltpu.CompilerParams(
            dimension_semantics=("parallel", "parallel"),
            vmem_limit_bytes=_VMEM_LIMIT_BYTES),
        cost_estimate=pl.CostEstimate(
            flops=n * feat,
            transcendentals=0,
            bytes_accessed=2 * n * feat * itemsize + n * itemsize),
        input_output_aliases=({1: 0} if donate_x else {}),
    )(scale, x_flat)

    # TODO(synk): for large drop_prob, skip the HBM read of dropped samples by
    # moving x to memory_space=pl.ANY and gating the copy on the mask (P4).
    return out_flat.reshape(x.shape)


def _drop_path_reference(x, drop_prob, training, rng_key):
    """Pure-JAX mirror of the PyTorch drop_path_f (same rng_key => same mask)."""
    if drop_prob == 0.0 or not training:
        return x
    keep_prob = 1.0 - drop_prob
    n = x.shape[0]
    u = jax.random.uniform(rng_key, (n,), dtype=jnp.float32)
    shape = (n,) + (1,) * (x.ndim - 1)
    random_tensor = jnp.floor(keep_prob + u).reshape(shape).astype(x.dtype)
    return x / keep_prob * random_tensor


if __name__ == "__main__":
    key = jax.random.PRNGKey(0)
    k_x1, k_x2, k_x3, k_d1, k_d2, k_d3 = jax.random.split(key, 6)
    drop_prob = 0.3

    # 1) Small NCHW activation (feat % 128 == 0): single-block path.
    x1 = jax.random.normal(k_x1, (2, 4, 16, 16), jnp.float32)
    out1 = jax.block_until_ready(drop_path(x1, drop_prob, training=True,
                                           rng_key=k_d1))
    ref1 = jax.block_until_ready(_drop_path_reference(x1, drop_prob, True, k_d1))
    assert out1.shape == x1.shape
    assert jnp.allclose(out1, ref1, atol=1e-5, rtol=1e-5), \
        float(jnp.max(jnp.abs(out1 - ref1)))

    # 2) Odd feature count (feat = 105): no wrapper pad, full-dim blocks.
    x2 = jax.random.normal(k_x2, (2, 3, 5, 7), jnp.float32)
    out2 = jax.block_until_ready(drop_path(x2, drop_prob, training=True,
                                           rng_key=k_d2))
    ref2 = jax.block_until_ready(_drop_path_reference(x2, drop_prob, True, k_d2))
    assert jnp.allclose(out2, ref2, atol=1e-5, rtol=1e-5)

    # 3) Ragged masked edges on both grid axes (batch 10 / block 8,
    #    feat 30000 / block 16384).
    x3 = jax.random.normal(k_x3, (10, 3, 100, 100), jnp.float32)
    out3 = jax.block_until_ready(drop_path(x3, drop_prob, training=True,
                                           rng_key=k_d3))
    ref3 = jax.block_until_ready(_drop_path_reference(x3, drop_prob, True, k_d3))
    assert jnp.allclose(out3, ref3, atol=1e-5, rtol=1e-5)

    # Eval mode / drop_prob == 0: identity fast path (same as PyTorch).
    out_eval = jax.block_until_ready(drop_path(x1, drop_prob, training=False))
    out_zero = jax.block_until_ready(drop_path(x1, 0.0, training=True,
                                               rng_key=k_d1))
    assert bool(jnp.array_equal(out_eval, x1))
    assert bool(jnp.array_equal(out_zero, x1))

    print("KERNEL_OK")
</pallas_src>

<mosaic_0001>
module attributes {stable_mosaic.version = 11 : i64} {
  func.func @_drop_path_kernel(%arg0: i32, %arg1: i32, %arg2: memref<2x1xf32, #tpu.memory_space<vmem>>, %arg3: memref<2x1024xf32, #tpu.memory_space<vmem>>, %arg4: memref<2x1024xf32, #tpu.memory_space<vmem>>) attributes {dimension_semantics = [#tpu.dimension_semantics<parallel>, #tpu.dimension_semantics<parallel>], iteration_bounds = array<i64: 1, 1>, scalar_prefetch = 0 : i64, scratch_operands = 0 : i64, tpu.core_type = #tpu.core_type<tc>, window_params = [{transform_indices = @transform_0, window_bounds = array<i64: 2, 1>}, {transform_indices = @transform_1, window_bounds = array<i64: 2, 1024>}, {transform_indices = @transform_2, window_bounds = array<i64: 2, 1024>}]} {
    %c0 = arith.constant 0 : index
    %c0_0 = arith.constant 0 : index
    %0 = vector.load %arg3[%c0, %c0_0] : memref<2x1024xf32, #tpu.memory_space<vmem>>, vector<2x1024xf32>
    %c0_1 = arith.constant 0 : index
    %c0_2 = arith.constant 0 : index
    %1 = vector.load %arg2[%c0_1, %c0_2] : memref<2x1xf32, #tpu.memory_space<vmem>>, vector<2x1xf32>
    %2 = vector.broadcast %1 : vector<2x1xf32> to vector<2x1024xf32>
    %3 = arith.mulf %0, %2 : vector<2x1024xf32>
    %c0_3 = arith.constant 0 : index
    %c0_4 = arith.constant 0 : index
    %4 = vector.load %arg4[%c0_3, %c0_4] : memref<2x1024xf32, #tpu.memory_space<vmem>>, vector<2x1024xf32>
    tpu.vector_store %arg4[%c0_3, %c0_4], %3 {strides = array<i32>} : memref<2x1024xf32, #tpu.memory_space<vmem>>, vector<2x1024xf32>,
    return
  }
  func.func @transform_0(%arg0: i32, %arg1: i32) -> (i32, i32) {
    %c0_i32 = arith.constant 0 : i32
    %c0_i32_0 = arith.constant 0 : i32
    return %arg0, %c0_i32 : i32, i32
  }
  func.func @transform_1(%arg0: i32, %arg1: i32) -> (i32, i32) {
    %c0_i32 = arith.constant 0 : i32
    return %arg0, %arg1 : i32, i32
  }
  func.func @transform_2(%arg0: i32, %arg1: i32) -> (i32, i32) {
    %c0_i32 = arith.constant 0 : i32
    return %arg0, %arg1 : i32, i32
  }
}

</mosaic_0001>

<llo_original>
// kernel: tpu_custom_call.1
$region0: #{tpu_custom_call.1}
  #allocation0 [shape = 'u32[]', space=smem, size = 0x4, offset = 0x4, fixed_abs, tag = 'smem constant byte address 0x4 - core index']
  #allocation1 [shape = 'u32[144,128]{1,0:T(1,128)}', space=vmem, size = 0x12000, scoped, tag = 'internal scratch']
  %s0 = inlined_call_operand.vmem [shape: f32[2,1], index: 0, kind: input, shape index: {}]
  %s1 = inlined_call_operand.hbm [shape: f32[2,1024], index: 1, kind: input, shape index: {}]
  %s2 = inlined_call_operand.hbm [shape: f32[2,1024], index: 2, kind: output, shape index: {}]
  %s3 = sld [smem:[#allocation0]]
  $region22: #{tpu_custom_call.1} parent=0
    _
  %s5 = ssub.s32 1, %s3
  %s6 = scalar_select 0, %s5, %s3
  $region1: #{tpu_custom_call.1} parent=0
    #allocation2 [shape = 'u8[8192]{0}', space=vmem, size = 0x2000, scoped, tag = 'input window, operand 1, single buffered']
    #allocation3 [shape = 's32[1]{0}', space=sflag, size = 0x4, scoped, tag = 'scoped memory for tpu_custom_call.1']
    #allocation4 [shape = 's32[1]{0}', space=sflag, size = 0x4, scoped, tag = 'scoped memory for tpu_custom_call.1']
    #allocation5 [shape = 'u8[8192]{0}', space=vmem, size = 0x2000, scoped, tag = 'output window, operand 0, single buffered']
    %7 = vsyncpa [#allocation3], 0
    %8 = vsyncpa [#allocation4], 0
    // Predicated region
    $region2: #{tpu_custom_call.1} parent=1 // pred_check
      _
    $region3: #{tpu_custom_call.1} parent=1 // pred_check_branch
      %10 = sbr.rel (0) target = $region5
    $region4: #{tpu_custom_call.1} parent=1 // pred_region
      _
    $region5: #{tpu_custom_call.1} parent=1 // pred_fallthru
      _
    // Predicated region
    $region6: #{tpu_custom_call.1} parent=1 // pred_check
      _
    $region7: #{tpu_custom_call.1} parent=1 // pred_check_branch
      %12 = sbr.rel (0) target = $region9
    $region8: #{tpu_custom_call.1} parent=1 // pred_region
      %s14 = ssub.s32 256, 256
      %15 = vsyncadd [#allocation3], %s14
      %s17 = sshll.u32 [#allocation2], 4
      %s18 = int_to_ptr.vmem [resolvable:$true] %s17
      %20 = dma.hbm_to_vmem [thread:$0]  %s1, 256, %s18, [#allocation3]
    $region9: #{tpu_custom_call.1} parent=1 // pred_fallthru
      _
    // Predicated region
    $region10: #{tpu_custom_call.1} parent=1 // pred_check
      _
    $region11: #{tpu_custom_call.1} parent=1 // pred_check_branch
      %22 = sbr.rel (0) target = $region13
    $region12: #{tpu_custom_call.1} parent=1 // pred_region
      %23 = dma.done [#allocation3], 256
    $region13: #{tpu_custom_call.1} parent=1 // pred_fallthru
      _
    %v24 = vld [vmem:[#allocation2] sm:$0xff]
    %v25 = vld [vmem:[#allocation2 + $0x8] sm:$0xff]
    %v26 = vld [vmem:[%s0] sm:$0x3]
    %28 = vset.pattern.permute.xlu0 0
    %29 = vperm.xlu0 %28, %v26
    %v30 = vpop.permute.xlu0 %29
    %v32 = vunpack.c.l.s4 269488144
    %v33 = vunpack.c.0.s8 %v32
    %v34 = vlaneseq
    %v35 = vshrl.u32 %v34, 7
    %v36 = vsub.s32 %v33, %v35
    %v37 = vrot.slane %v30, %v36
    %v39 = vmul.f32 %v24, %v37
    %v40 = vmul.f32 %v25, %v37
    %41 = vst [vmem:[#allocation5] sm:$0xff] %v39
    %42 = vst [vmem:[#allocation5 + $0x8] sm:$0xff] %v40
    // Predicated region
    $region14: #{tpu_custom_call.1} parent=1 // pred_check
      _
    $region15: #{tpu_custom_call.1} parent=1 // pred_check_branch
      %44 = sbr.rel (0) target = $region17
    $region16: #{tpu_custom_call.1} parent=1 // pred_region
      %s46 = ssub.s32 256, 256
      %47 = vsyncadd [#allocation4], %s46
      %s49 = sshll.u32 [#allocation5], 4
      %s50 = int_to_ptr.vmem [resolvable:$true] %s49
      %52 = dma.vmem_to_hbm [thread:$0]  %s50, 256, %s2, [#allocation4]
    $region17: #{tpu_custom_call.1} parent=1 // pred_fallthru
      _
    // Predicated region
    $region18: #{tpu_custom_call.1} parent=1 // pred_check
      _
    $region19: #{tpu_custom_call.1} parent=1 // pred_check_branch
      %54 = sbr.rel (0) target = $region21
    $region20: #{tpu_custom_call.1} parent=1 // pred_region
      %55 = dma.done [#allocation4], 256
    $region21: #{tpu_custom_call.1} parent=1 // pred_fallthru
      _
    %56 = vsyncpa [#allocation3], 1
    %57 = vsyncpa [#allocation4], 1

</llo_original>
